<compile_context>
chip_gen: v6e
topology: v6e:2x2x1
jax: 0.10.0
libtpu: 0.0.40
codegen_flags: <defaults>
</compile_context>

<pallas_src>
import functools
import math

import jax
import jax.numpy as jnp
from jax.experimental import pallas as pl
from jax.experimental.pallas import tpu as pltpu

_EXPANSION = 4
_RESNET152_LAYERS = ((64, 3, 1), (128, 8, 2), (256, 36, 2), (512, 3, 2))
_MAXPOOL_PAD = -3e38                      # representable in bf16, never selected by max
_TILE_BUDGET_BYTES = 20 * 1024 * 1024     # double-buffered tile budget (safe on v5e/v6e/v7x)


def _round_up(x, m):
    return (x + m - 1) // m * m


def _pick_tile(dim, candidates):
    for c in candidates:
        if dim % c == 0:
            return c
    return dim


def _detect_num_tensorcores():
    # Only v7x has 2 TensorCores per chip that benefit from splitting N.
    try:
        kind = jax.devices()[0].device_kind.lower()
        return 2 if "v7" in kind else 1
    except Exception:  # pragma: no cover
        return 1


_NUM_TC = _detect_num_tensorcores()


# ---------------------------------------------------------------------------
# Fused matmul: o = [relu]((x @ w) + bias [+ residual])   (bf16 in / bf16 out,
# f32 MXU accumulation, f32 epilogue).  Weights arrive pre-folded / pre-padded
# in bf16, so the only runtime data movement is the (tiny) activation pad.
# ---------------------------------------------------------------------------
def _mm_kernel_single(*refs, relu, has_residual):
    if has_residual:
        x_ref, w_ref, b_ref, r_ref, o_ref = refs
    else:
        x_ref, w_ref, b_ref, o_ref = refs
        r_ref = None
    acc = jnp.dot(x_ref[...], w_ref[...], preferred_element_type=jnp.float32)
    acc = acc + b_ref[...]
    if has_residual:
        acc = acc + r_ref[...].astype(jnp.float32)
    if relu:
        acc = jnp.maximum(acc, 0.0)
    o_ref[...] = acc.astype(o_ref.dtype)


def _mm_kernel_multi(*refs, relu, has_residual):
    if has_residual:
        x_ref, w_ref, b_ref, r_ref, o_ref, acc_ref = refs
    else:
        x_ref, w_ref, b_ref, o_ref, acc_ref = refs
        r_ref = None

    @pl.when(pl.program_id(2) == 0)
    def _():
        acc_ref[...] = jnp.zeros_like(acc_ref)

    acc_ref[...] += jnp.dot(x_ref[...], w_ref[...],
                            preferred_element_type=jnp.float32)

    @pl.when(pl.program_id(2) == pl.num_programs(2) - 1)
    def _():
        acc = acc_ref[...] + b_ref[...]
        if has_residual:
            acc = acc + r_ref[...].astype(jnp.float32)
        if relu:
            acc = jnp.maximum(acc, 0.0)
        o_ref[...] = acc.astype(o_ref.dtype)


def _select_tiles(Mp, Kp, N, has_residual):
    tm = _pick_tile(Mp, (256, 128, 64, 32, 16))
    tn = N
    # v7x: give both TensorCores a parallel N block when the M grid is a single block.
    if _NUM_TC >= 2 and Mp // tm == 1 and N >= 256 and (N // 2) % 128 == 0:
        tn = N // 2

    def footprint(tk, multi):
        tiles = (tm * tk + tk * tn + tm * tn) * 2 + tn * 4     # bf16 x/w/out + f32 bias
        if has_residual:
            tiles += tm * tn * 2
        fb = 2 * tiles                                          # pipeline double-buffering
        if multi:
            fb += tm * tn * 4                                   # f32 accumulator scratch
        return fb

    if footprint(Kp, False) <= _TILE_BUDGET_BYTES:              # single K step
        return tm, tn, Kp, False, footprint(Kp, False)
    for tk in (4096, 2048, 1024, 512, 256, 128):                # tiled-K fallback
        if Kp % tk == 0 and footprint(tk, True) <= _TILE_BUDGET_BYTES:
            return tm, tn, tk, True, footprint(tk, True)
    return tm, tn, 128, True, footprint(128, True)


def fused_matmul(x, w, bias, residual=None, *, relu=False):
    """x: (M, K) bf16 activation, w: (Kp, N) bf16 pre-folded weight, bias: (1, N) f32."""
    M, K = x.shape
    Kp, N = w.shape
    Mp = _round_up(M, 16)

    if x.dtype != jnp.bfloat16:
        x = x.astype(jnp.bfloat16)
    if Mp != M or Kp != K:
        x = jnp.pad(x, ((0, Mp - M), (0, Kp - K)))

    has_residual = residual is not None
    if has_residual:
        if residual.dtype != jnp.bfloat16:
            residual = residual.astype(jnp.bfloat16)
        if Mp != M:
            residual = jnp.pad(residual, ((0, Mp - M), (0, 0)))

    tm, tn, tk, multi_k, footprint = _select_tiles(Mp, Kp, N, has_residual)
    vmem_limit = int(min(48 * 1024 * 1024,
                         max(32 * 1024 * 1024, footprint + 8 * 1024 * 1024)))

    flops = 2 * Mp * N * Kp
    bytes_accessed = (Mp * Kp + Kp * N + Mp * N) * 2 + N * 4 \
        + (Mp * N * 2 if has_residual else 0)
    cost = pl.CostEstimate(flops=flops, transcendentals=0,
                           bytes_accessed=bytes_accessed)

    args = [x, w, bias] + ([residual] if has_residual else [])

    if not multi_k:
        in_specs = [pl.BlockSpec((tm, Kp), lambda i, j: (i, 0)),
                    pl.BlockSpec((Kp, tn), lambda i, j: (0, j)),
                    pl.BlockSpec((1, tn), lambda i, j: (0, j))]
        if has_residual:
            in_specs.append(pl.BlockSpec((tm, tn), lambda i, j: (i, j)))
        out = pl.pallas_call(
            functools.partial(_mm_kernel_single, relu=relu,
                              has_residual=has_residual),
            out_shape=jax.ShapeDtypeStruct((Mp, N), jnp.bfloat16),
            grid_spec=pltpu.PrefetchScalarGridSpec(
                num_scalar_prefetch=0,
                grid=(Mp // tm, N // tn),
                in_specs=in_specs,
                out_specs=pl.BlockSpec((tm, tn), lambda i, j: (i, j))),
            compiler_params=pltpu.CompilerParams(
                dimension_semantics=("parallel", "parallel"),
                vmem_limit_bytes=vmem_limit),
            cost_estimate=cost,
        )(*args)
    else:
        in_specs = [pl.BlockSpec((tm, tk), lambda i, j, k: (i, k)),
                    pl.BlockSpec((tk, tn), lambda i, j, k: (k, j)),
                    pl.BlockSpec((1, tn), lambda i, j, k: (0, j))]
        if has_residual:
            in_specs.append(pl.BlockSpec((tm, tn), lambda i, j, k: (i, j)))
        out = pl.pallas_call(
            functools.partial(_mm_kernel_multi, relu=relu,
                              has_residual=has_residual),
            out_shape=jax.ShapeDtypeStruct((Mp, N), jnp.bfloat16),
            grid_spec=pltpu.PrefetchScalarGridSpec(
                num_scalar_prefetch=0,
                grid=(Mp // tm, N // tn, Kp // tk),
                in_specs=in_specs,
                out_specs=pl.BlockSpec((tm, tn), lambda i, j, k: (i, j)),
                scratch_shapes=[pltpu.VMEM((tm, tn), jnp.float32)]),
            compiler_params=pltpu.CompilerParams(
                dimension_semantics=("parallel", "parallel", "arbitrary"),
                vmem_limit_bytes=vmem_limit),
            cost_estimate=cost,
        )(*args)

    return out[:M] if Mp != M else out


# ---------------------------------------------------------------------------
# Pooling kernels
# ---------------------------------------------------------------------------
def _maxpool_kernel(p_ref, o_ref):
    p = p_ref[...].astype(jnp.float32)          # (9, tm, C), tap-major
    o_ref[...] = jnp.max(p, axis=0).astype(o_ref.dtype)


@jax.jit
def maxpool_3x3_s2_p1(x):
    B, H, W, C = x.shape
    xp = jnp.pad(x, ((0, 0), (1, 1), (1, 1), (0, 0)), constant_values=_MAXPOOL_PAD)
    Ho = (H + 2 - 3) // 2 + 1
    Wo = (W + 2 - 3) // 2 + 1
    cols = [xp[:, i:i + 2 * Ho:2, j:j + 2 * Wo:2, :]
            for i in range(3) for j in range(3)]
    # Tap-major layout: each tap is a clean contiguous (M, C) slab.
    patches = jnp.stack(cols, axis=0).reshape(9, B * Ho * Wo, C)
    M = B * Ho * Wo
    Mp = _round_up(M, 16)
    if Mp != M:
        patches = jnp.pad(patches, ((0, 0), (0, Mp - M), (0, 0)),
                          constant_values=_MAXPOOL_PAD)
    tm = _pick_tile(Mp, (512, 256, 128, 64, 32, 16))
    out = pl.pallas_call(
        _maxpool_kernel,
        out_shape=jax.ShapeDtypeStruct((Mp, C), x.dtype),
        grid=(Mp // tm,),
        in_specs=[pl.BlockSpec((9, tm, C), lambda i: (0, i, 0))],
        out_specs=pl.BlockSpec((tm, C), lambda i: (i, 0)),
        compiler_params=pltpu.CompilerParams(dimension_semantics=("parallel",)),
    )(patches)
    return out[:M].reshape(B, Ho, Wo, C)


def _avgpool_kernel(x_ref, o_ref):
    x = x_ref[...].astype(jnp.float32)           # (B, H*W, tc)
    o_ref[...] = jnp.sum(x, axis=1) * (1.0 / x.shape[1])


@jax.jit
def global_avgpool(x):
    B, H, W, C = x.shape
    x3 = x.reshape(B, H * W, C)
    tc = _pick_tile(C, (512, 256, 128, 64, 32, 16, 8))
    return pl.pallas_call(
        _avgpool_kernel,
        out_shape=jax.ShapeDtypeStruct((B, C), jnp.float32),
        grid=(C // tc,),
        in_specs=[pl.BlockSpec((B, H * W, tc), lambda i: (0, 0, i))],
        out_specs=pl.BlockSpec((B, tc), lambda i: (0, i)),
        compiler_params=pltpu.CompilerParams(dimension_semantics=("parallel",)),
    )(x3)


# ---------------------------------------------------------------------------
# Fused MLP head: linear0+ReLU, concat, linear1+ReLU, linear2, softmax, linear3
# (all dims tiny -> one kernel launch, everything stays in VMEM)
# ---------------------------------------------------------------------------
def _head_kernel(out1_ref, state_ref, w0_ref, b0_ref, w1a_ref, w1b_ref, b1_ref,
                 w2_ref, b2_ref, w3_ref, b3_ref, o_ref):
    out2 = jnp.dot(state_ref[...], w0_ref[...], preferred_element_type=jnp.float32)
    out2 = jnp.maximum(out2 + b0_ref[...], 0.0)
    h = jnp.dot(out1_ref[...], w1a_ref[...], preferred_element_type=jnp.float32)
    h = h + jnp.dot(out2, w1b_ref[...], preferred_element_type=jnp.float32)
    h = jnp.maximum(h + b1_ref[...], 0.0)
    z = jnp.dot(h, w2_ref[...], preferred_element_type=jnp.float32) + b2_ref[...]
    z = z - jnp.max(z, axis=-1, keepdims=True)
    e = jnp.exp(z)
    sm = e / jnp.sum(e, axis=-1, keepdims=True)   # nn.Softmax() on 2-D => dim=1
    o_ref[...] = (jnp.dot(sm, w3_ref[...], preferred_element_type=jnp.float32)
                  + b3_ref[...])


@jax.jit
def fused_head(out1, state, w0, b0, w1a, w1b, b1, w2, b2, w3, b3):
    B = out1.shape[0]
    out_size = w3.shape[1]
    operands = (out1, state, w0, b0, w1a, w1b, b1, w2, b2, w3, b3)

    def full_spec(a):
        nd = a.ndim
        return pl.BlockSpec(a.shape, lambda *_: (0,) * nd)

    return pl.pallas_call(
        _head_kernel,
        out_shape=jax.ShapeDtypeStruct((B, out_size), jnp.float32),
        grid=(1,),
        in_specs=[full_spec(a) for a in operands],
        out_specs=pl.BlockSpec((B, out_size), lambda i: (0, 0)),
    )(*operands)


# ---------------------------------------------------------------------------
# Glue: im2col (data movement only; all MACs run in the Pallas matmul)
# ---------------------------------------------------------------------------
def _im2col(x, kh, kw, stride, pad):
    """x: (B, H, W, C) NHWC -> (B*Ho*Wo, kh*kw*C), Ho, Wo."""
    B, H, W, C = x.shape
    if pad:
        x = jnp.pad(x, ((0, 0), (pad, pad), (pad, pad), (0, 0)))
    Ho = (H + 2 * pad - kh) // stride + 1
    Wo = (W + 2 * pad - kw) // stride + 1
    cols = [x[:, i:i + stride * Ho:stride, j:j + stride * Wo:stride, :]
            for i in range(kh) for j in range(kw)]
    patches = jnp.stack(cols, axis=3)  # (B, Ho, Wo, kh*kw, C)
    return patches.reshape(B * Ho * Wo, kh * kw * C), Ho, Wo


@functools.partial(jax.jit, static_argnames=("kh", "kw", "stride", "pad", "relu"))
def conv_bn_act(x, w, bias, residual=None, *, kh, kw, stride, pad, relu):
    """conv2d (no bias) + folded eval-mode BatchNorm + optional residual add + ReLU.

    `w` is pre-folded/pre-padded bf16 of shape (round_up(kh*kw*cin, 128), cout)."""
    B, H, W, cin = x.shape
    cout = w.shape[1]
    if x.dtype != jnp.bfloat16:
        x = x.astype(jnp.bfloat16)
    if kh == 1 and kw == 1:
        xs = x[:, ::stride, ::stride, :] if stride > 1 else x
        Ho, Wo = xs.shape[1], xs.shape[2]
        x2d = xs.reshape(B * Ho * Wo, cin)
    else:
        x2d, Ho, Wo = _im2col(x, kh, kw, stride, pad)
    r2d = residual.reshape(B * Ho * Wo, cout) if residual is not None else None
    y = fused_matmul(x2d, w, bias, residual=r2d, relu=relu)  # (M, cout) bf16
    return y.reshape(B, Ho, Wo, cout)


# ---------------------------------------------------------------------------
# Deterministic parameter construction (synthetic; shapes match resnet152).
# Weights are folded (BN scale), reshaped, K-padded to 128 and cast to bf16 ONCE here.
# ---------------------------------------------------------------------------
class _KeyGen:
    def __init__(self, seed):
        self._key = jax.random.PRNGKey(seed)
        self._n = 0

    def __call__(self):
        self._n += 1
        return jax.random.fold_in(self._key, self._n)


def _init_conv_bn(kg, kh, kw, cin, cout):
    w = jax.random.normal(kg(), (kh, kw, cin, cout), jnp.float32) / math.sqrt(kh * kw * cin)
    gamma = 1.0 + 0.1 * jax.random.normal(kg(), (cout,), jnp.float32)
    beta = 0.1 * jax.random.normal(kg(), (cout,), jnp.float32)
    rmean = 0.1 * jax.random.normal(kg(), (cout,), jnp.float32)
    rvar = 1.0 + 0.1 * jax.random.uniform(kg(), (cout,), jnp.float32)
    scale = gamma / jnp.sqrt(rvar + 1e-5)      # eval-mode BatchNorm
    bias = beta - rmean * scale
    K = kh * kw * cin
    Kp = _round_up(K, 128)
    w2d = w.reshape(K, cout) * scale[None, :]  # fold BN scale in f32 ...
    w2d = jnp.pad(w2d, ((0, Kp - K), (0, 0))).astype(jnp.bfloat16)  # ... then pad + bf16 cast
    return {"w": w2d, "b": bias.reshape(1, cout)}


def _init_linear(kg, cin, cout):
    w = jax.random.normal(kg(), (cin, cout), jnp.float32) / math.sqrt(cin)
    b = 0.01 * jax.random.normal(kg(), (cout,), jnp.float32)
    return {"w": w, "b": b.reshape(1, cout)}


def init_params(seed, scalar_size, hidden_size, output_size):
    kg = _KeyGen(seed)
    params = {"stem": _init_conv_bn(kg, 7, 7, 1, 64), "layers": []}
    inplanes = 64
    for planes, blocks, stride in _RESNET152_LAYERS:
        layer = []
        for b in range(blocks):
            s = stride if b == 0 else 1
            blk = {
                "stride": s,
                "conv1": _init_conv_bn(kg, 1, 1, inplanes, planes),
                "conv2": _init_conv_bn(kg, 3, 3, planes, planes),
                "conv3": _init_conv_bn(kg, 1, 1, planes, planes * _EXPANSION),
                "downsample": (_init_conv_bn(kg, 1, 1, inplanes, planes * _EXPANSION)
                               if b == 0 else None),
            }
            layer.append(blk)
            inplanes = planes * _EXPANSION
        params["layers"].append(layer)

    lin_input = inplanes  # 2048 == resnet152.fc.in_features
    l1 = _init_linear(kg, 2 * lin_input, hidden_size)
    params["linear0"] = _init_linear(kg, scalar_size, lin_input)
    params["linear1"] = {"w_img": l1["w"][:lin_input],     # torch.cat((out1, out2)) order
                         "w_state": l1["w"][lin_input:],
                         "b": l1["b"]}
    params["linear2"] = _init_linear(kg, hidden_size, hidden_size)
    params["linear3"] = _init_linear(kg, hidden_size, output_size)
    return params


# ---------------------------------------------------------------------------
# Forward pass
# ---------------------------------------------------------------------------
def _bottleneck(x, blk):
    out = conv_bn_act(x, blk["conv1"]["w"], blk["conv1"]["b"],
                      kh=1, kw=1, stride=1, pad=0, relu=True)
    out = conv_bn_act(out, blk["conv2"]["w"], blk["conv2"]["b"],
                      kh=3, kw=3, stride=blk["stride"], pad=1, relu=True)
    if blk["downsample"] is not None:
        ds = blk["downsample"]
        identity = conv_bn_act(x, ds["w"], ds["b"],
                               kh=1, kw=1, stride=blk["stride"], pad=0, relu=False)
    else:
        identity = x
    # residual add + ReLU fused into the conv3 matmul epilogue
    out = conv_bn_act(out, blk["conv3"]["w"], blk["conv3"]["b"], residual=identity,
                      kh=1, kw=1, stride=1, pad=0, relu=True)
    return out


def resnet152_features(image_nchw, params):
    x = jnp.transpose(image_nchw, (0, 2, 3, 1))  # NCHW -> NHWC (cast to bf16 inside stem conv)
    stem = params["stem"]
    x = conv_bn_act(x, stem["w"], stem["b"], kh=7, kw=7, stride=2, pad=3, relu=True)
    x = maxpool_3x3_s2_p1(x)
    for layer in params["layers"]:
        for blk in layer:
            x = _bottleneck(x, blk)
    return global_avgpool(x)  # AdaptiveAvgPool2d((1,1)) + flatten -> (B, 2048) f32


def image_state_resnet152_forward(params, image, state):
    out1 = resnet152_features(image, params)  # (B, 2048)
    return fused_head(out1, state.astype(jnp.float32),
                      params["linear0"]["w"], params["linear0"]["b"],
                      params["linear1"]["w_img"], params["linear1"]["w_state"],
                      params["linear1"]["b"],
                      params["linear2"]["w"], params["linear2"]["b"],
                      params["linear3"]["w"], params["linear3"]["b"])


# ---------------------------------------------------------------------------
if __name__ == "__main__":
    batch = 2
    image_size = 16
    scalar_size = 8
    hidden_size = 32
    output_size = 4

    params = init_params(0, scalar_size, hidden_size, output_size)

    key = jax.random.PRNGKey(0)
    k_img, k_state = jax.random.split(key)
    image = jax.random.normal(k_img, (batch, 1, image_size, image_size), jnp.float32)
    state = jax.random.normal(k_state, (batch, scalar_size), jnp.float32)

    out = image_state_resnet152_forward(params, image, state)
    out = jax.block_until_ready(out)

    assert out.shape == (batch, output_size), out.shape
    assert bool(jnp.all(jnp.isfinite(out)))
    print("KERNEL_OK")
</pallas_src>

<mosaic_0001>
module attributes {stable_mosaic.version = 11 : i64} {
  func.func @_mm_kernel_single(%arg0: i32, %arg1: i32, %arg2: memref<128x128xbf16, #tpu.memory_space<vmem>>, %arg3: memref<128x64xbf16, #tpu.memory_space<vmem>>, %arg4: memref<1x64xf32, #tpu.memory_space<vmem>>, %arg5: memref<128x64xbf16, #tpu.memory_space<vmem>>) attributes {dimension_semantics = [#tpu.dimension_semantics<parallel>, #tpu.dimension_semantics<parallel>], iteration_bounds = array<i64: 1, 1>, scalar_prefetch = 0 : i64, scratch_operands = 0 : i64, tpu.core_type = #tpu.core_type<tc>, window_params = [{transform_indices = @transform_0, window_bounds = array<i64: 128, 128>}, {transform_indices = @transform_1, window_bounds = array<i64: 128, 64>}, {transform_indices = @transform_2, window_bounds = array<i64: 1, 64>}, {transform_indices = @transform_3, window_bounds = array<i64: 128, 64>}]} {
    %c0 = arith.constant 0 : index
    %c0_0 = arith.constant 0 : index
    %0 = vector.load %arg2[%c0, %c0_0] : memref<128x128xbf16, #tpu.memory_space<vmem>>, vector<128x128xbf16>
    %c0_1 = arith.constant 0 : index
    %c0_2 = arith.constant 0 : index
    %1 = vector.load %arg3[%c0_1, %c0_2] : memref<128x64xbf16, #tpu.memory_space<vmem>>, vector<128x64xbf16>
    %cst = arith.constant dense<0.000000e+00> : vector<128x64xf32>
    %2 = tpu.matmul %0, %1, %cst {dimension_numbers = #tpu.dot_dimension_numbers<[1], [0], [0], [1], [0, 0, 1, 1], [], []>} : vector<128x128xbf16>, vector<128x64xbf16>, vector<128x64xf32> -> vector<128x64xf32>
    %c0_3 = arith.constant 0 : index
    %c0_4 = arith.constant 0 : index
    %3 = vector.load %arg4[%c0_3, %c0_4] : memref<1x64xf32, #tpu.memory_space<vmem>>, vector<1x64xf32>
    %4 = vector.broadcast %3 : vector<1x64xf32> to vector<128x64xf32>
    %5 = arith.addf %2, %4 : vector<128x64xf32>
    %cst_5 = arith.constant 0.000000e+00 : f32
    %6 = vector.broadcast %cst_5 : f32 to vector<128x64xf32>
    %7 = arith.maximumf %5, %6 : vector<128x64xf32>
    %8 = arith.truncf %7 : vector<128x64xf32> to vector<128x64xbf16>
    %c0_6 = arith.constant 0 : index
    %c0_7 = arith.constant 0 : index
    %9 = vector.load %arg5[%c0_6, %c0_7] : memref<128x64xbf16, #tpu.memory_space<vmem>>, vector<128x64xbf16>
    tpu.vector_store %arg5[%c0_6, %c0_7], %8 {strides = array<i32>} : memref<128x64xbf16, #tpu.memory_space<vmem>>, vector<128x64xbf16>,
    return
  }
  func.func @transform_0(%arg0: i32, %arg1: i32) -> (i32, i32) {
    %c0_i32 = arith.constant 0 : i32
    %c0_i32_0 = arith.constant 0 : i32
    return %arg0, %c0_i32 : i32, i32
  }
  func.func @transform_1(%arg0: i32, %arg1: i32) -> (i32, i32) {
    %c0_i32 = arith.constant 0 : i32
    %c0_i32_0 = arith.constant 0 : i32
    return %c0_i32, %arg1 : i32, i32
  }
  func.func @transform_2(%arg0: i32, %arg1: i32) -> (i32, i32) {
    %c0_i32 = arith.constant 0 : i32
    %c0_i32_0 = arith.constant 0 : i32
    return %c0_i32, %arg1 : i32, i32
  }
  func.func @transform_3(%arg0: i32, %arg1: i32) -> (i32, i32) {
    %c0_i32 = arith.constant 0 : i32
    return %arg0, %arg1 : i32, i32
  }
}

</mosaic_0001>

<llo_original>
// kernel: conv_bn_act.1
$region0: #{conv_bn_act.1}
  #allocation0 [shape = 'u32[]', space=smem, size = 0x4, offset = 0x4, fixed_abs, tag = 'smem constant byte address 0x4 - core index']
  #allocation1 [shape = 'u32[144,128]{1,0:T(1,128)}', space=vmem, size = 0x12000, scoped, tag = 'internal scratch']
  %s0 = inlined_call_operand.vmem [shape: bf16[128,128], index: 0, kind: input, shape index: {}]
  %s1 = inlined_call_operand.vmem [shape: bf16[128,64], index: 1, kind: input, shape index: {}]
  %s2 = inlined_call_operand.vmem [shape: f32[1,64], index: 2, kind: input, shape index: {}]
  %s3 = inlined_call_operand.hbm [shape: bf16[128,64], index: 3, kind: output, shape index: {}]
  %s4 = sld [smem:[#allocation0]]
  $region22: #{conv_bn_act.1} parent=0
    _
  %s6 = ssub.s32 1, %s4
  %s7 = scalar_select 0, %s6, %s4
  $region1: #{conv_bn_act.1} parent=0
    #allocation2 [shape = 'u8[32768]{0}', space=vmem, size = 0x8000, scoped, tag = 'output window, operand 0, single buffered']
    #allocation3 [shape = 's32[1]{0}', space=sflag, size = 0x4, scoped, tag = 'scoped memory for conv_bn_act.1']
    %8 = vsyncpa [#allocation3], 0
    // Predicated region
    $region2: #{conv_bn_act.1} parent=1 // pred_check
      _
    $region3: #{conv_bn_act.1} parent=1 // pred_check_branch
      %10 = sbr.rel (0) target = $region5
    $region4: #{conv_bn_act.1} parent=1 // pred_region
      _
    $region5: #{conv_bn_act.1} parent=1 // pred_fallthru
      _
    // Predicated region
    $region6: #{conv_bn_act.1} parent=1 // pred_check
      _
    $region7: #{conv_bn_act.1} parent=1 // pred_check_branch
      %12 = sbr.rel (0) target = $region9
    $region8: #{conv_bn_act.1} parent=1 // pred_region
      _
    $region9: #{conv_bn_act.1} parent=1 // pred_fallthru
      _
    // Predicated region
    $region10: #{conv_bn_act.1} parent=1 // pred_check
      _
    $region11: #{conv_bn_act.1} parent=1 // pred_check_branch
      %14 = sbr.rel (0) target = $region13
    $region12: #{conv_bn_act.1} parent=1 // pred_region
      _
    $region13: #{conv_bn_act.1} parent=1 // pred_fallthru
      _
    %v16 = vld [vmem:[%s0] sm:$0xf]
    %v17 = vld [vmem:[%s0 + $0x4] sm:$0xf]
    %v18 = vld [vmem:[%s0 + $0x8] sm:$0xf]
    %v19 = vld [vmem:[%s0 + $0xc] sm:$0xf]
    %v20 = vld [vmem:[%s0 + $0x10] sm:$0xf]
    %v21 = vld [vmem:[%s0 + $0x14] sm:$0xf]
    %v22 = vld [vmem:[%s0 + $0x18] sm:$0xf]
    %v23 = vld [vmem:[%s0 + $0x1c] sm:$0xf]
    %v24 = vld [vmem:[%s0 + $0x20] sm:$0xf]
    %v25 = vld [vmem:[%s0 + $0x24] sm:$0xf]
    %v26 = vld [vmem:[%s0 + $0x28] sm:$0xf]
    %v27 = vld [vmem:[%s0 + $0x2c] sm:$0xf]
    %v28 = vld [vmem:[%s0 + $0x30] sm:$0xf]
    %v29 = vld [vmem:[%s0 + $0x34] sm:$0xf]
    %v30 = vld [vmem:[%s0 + $0x38] sm:$0xf]
    %v31 = vld [vmem:[%s0 + $0x3c] sm:$0xf]
    %v32 = vld [vmem:[%s1] sm:$0xf]
    %v33 = vld [vmem:[%s1 + $0x4] sm:$0xf]
    %v34 = vld [vmem:[%s1 + $0x8] sm:$0xf]
    %v35 = vld [vmem:[%s1 + $0xc] sm:$0xf]
    %v36 = vld [vmem:[%s1 + $0x10] sm:$0xf]
    %v37 = vld [vmem:[%s1 + $0x14] sm:$0xf]
    %v38 = vld [vmem:[%s1 + $0x18] sm:$0xf]
    %v39 = vld [vmem:[%s1 + $0x1c] sm:$0xf]
    %v40 = vld [vmem:[%s1 + $0x20] sm:$0xf]
    %v41 = vld [vmem:[%s1 + $0x24] sm:$0xf]
    %v42 = vld [vmem:[%s1 + $0x28] sm:$0xf]
    %v43 = vld [vmem:[%s1 + $0x2c] sm:$0xf]
    %v44 = vld [vmem:[%s1 + $0x30] sm:$0xf]
    %v45 = vld [vmem:[%s1 + $0x34] sm:$0xf]
    %v46 = vld [vmem:[%s1 + $0x38] sm:$0xf]
    %v47 = vld [vmem:[%s1 + $0x3c] sm:$0xf]
    %v48 = vld [vmem:[%s2] sm:$0x1]
    %v50 = vlaneseq
    %v51 = vshrl.u32 %v50, 7
    %v52 = vsub.s32 0, %v51
    %v53 = vrot.slane %v48, %v52
    %v71 = vunpack.c.l.b16 %v16
    %v72 = vunpack.c.l.b16 %v17
    %v73 = vunpack.c.l.b16 %v18
    %v74 = vunpack.c.l.b16 %v19
    %v75 = vunpack.c.l.b16 %v20
    %v76 = vunpack.c.l.b16 %v21
    %v77 = vunpack.c.l.b16 %v22
    %v78 = vunpack.c.l.b16 %v23
    %v79 = vunpack.c.l.b16 %v24
    %v80 = vunpack.c.l.b16 %v25
    %v81 = vunpack.c.l.b16 %v26
    %v82 = vunpack.c.l.b16 %v27
    %v83 = vunpack.c.l.b16 %v28
    %v84 = vunpack.c.l.b16 %v29
    %v85 = vunpack.c.l.b16 %v30
    %v86 = vunpack.c.l.b16 %v31
    %v87 = vpack.c.b16 %v72, %v71
    %v88 = vpack.c.b16 %v74, %v73
    %v89 = vpack.c.b16 %v76, %v75
    %v90 = vpack.c.b16 %v78, %v77
    %v91 = vpack.c.b16 %v80, %v79
    %v92 = vpack.c.b16 %v82, %v81
    %v93 = vpack.c.b16 %v84, %v83
    %v94 = vpack.c.b16 %v86, %v85
    %v119 = vunpack.c.l.b16 %v32
    %v120 = vunpack.c.l.b16 %v33
    %v121 = vunpack.c.l.b16 %v34
    %v122 = vunpack.c.l.b16 %v35
    %v123 = vunpack.c.l.b16 %v36
    %v124 = vunpack.c.l.b16 %v37
    %v125 = vunpack.c.l.b16 %v38
    %v126 = vunpack.c.l.b16 %v39
    %v127 = vunpack.c.l.b16 %v40
    %v128 = vunpack.c.l.b16 %v41
    %v129 = vunpack.c.l.b16 %v42
    %v130 = vunpack.c.l.b16 %v43
    %v131 = vunpack.c.l.b16 %v44
    %v132 = vunpack.c.l.b16 %v45
    %v133 = vunpack.c.l.b16 %v46
    %v134 = vunpack.c.l.b16 %v47
    %v135 = vpack.c.b16 %v120, %v119
    %v136 = vpack.c.b16 %v122, %v121
    %v137 = vpack.c.b16 %v124, %v123
    %v138 = vpack.c.b16 %v126, %v125
    %v139 = vpack.c.b16 %v128, %v127
    %v140 = vpack.c.b16 %v130, %v129
    %v141 = vpack.c.b16 %v132, %v131
    %v142 = vpack.c.b16 %v134, %v133
    %151 = vmatprep.subr.bf16.mxu0 0
    %152 = vmatpush1.bf16.msra.mxu0 %v142
    %153 = vmatprep.subr.bf16.mxu0 0
    %154 = vmatpush1.bf16.msra.mxu0 %v141
    %155 = vmatprep.subr.bf16.mxu0 0
    %156 = vmatpush1.bf16.msra.mxu0 %v140
    %157 = vmatprep.subr.bf16.mxu0 0
    %158 = vmatpush1.bf16.msra.mxu0 %v139
    %159 = vmatprep.subr.bf16.mxu0 0
    %160 = vmatpush1.bf16.msra.mxu0 %v138
    %161 = vmatprep.subr.bf16.mxu0 0
    %162 = vmatpush1.bf16.msra.mxu0 %v137
    %163 = vmatprep.subr.bf16.mxu0 0
    %164 = vmatpush1.bf16.msra.mxu0 %v136
    %165 = vmatprep.subr.bf16.mxu0 0
    %166 = vmatpush1.bf16.msra.mxu0 %v135
    %167 = vmatprep.subr.bf16.mxu0 0
    %168 = vmatpush2.bf16.msra.mxu0 0
    %169 = vmatprep.subr.bf16.mxu0 0
    %170 = vmatpush2.bf16.msra.mxu0 0
    %171 = vmatprep.subr.bf16.mxu0 0
    %172 = vmatpush2.bf16.msra.mxu0 0
    %173 = vmatprep.subr.bf16.mxu0 0
    %174 = vmatpush2.bf16.msra.mxu0 0
    %175 = vmatprep.subr.bf16.mxu0 0
    %176 = vmatpush2.bf16.msra.mxu0 0
    %177 = vmatprep.subr.bf16.mxu0 0
    %178 = vmatpush2.bf16.msra.mxu0 0
    %179 = vmatprep.subr.bf16.mxu0 0
    %180 = vmatpush2.bf16.msra.mxu0 0
    %181 = vmatprep.subr.bf16.mxu0 0
    %182 = vmatpush2.bf16.msra.mxu0 0
    %183 = vmatprep.mubr.bf16.mxu0 0
    %184 = vmatmul.mubr.bf16.gmra.mxu0 %v87
    %v185 = vpop.f32.mrf.mxu0
    %v186 = vadd.f32 %v53, %v185
    %v187 = vpop.f32.mrf.mxu0
    %v188 = vpop.f32.mrf.mxu0
    %v189 = vadd.f32 %v53, %v188
    %v190 = vpop.f32.mrf.mxu0
    %191 = vmatprep.mubr.bf16.mxu0 0
    %192 = vmatmul.mubr.bf16.gmra.mxu0 %v88
    %v193 = vpop.f32.mrf.mxu0
    %v194 = vadd.f32 %v53, %v193
    %v195 = vpop.f32.mrf.mxu0
    %v196 = vpop.f32.mrf.mxu0
    %v197 = vadd.f32 %v53, %v196
    %v198 = vpop.f32.mrf.mxu0
    %199 = vmatprep.mubr.bf16.mxu0 0
    %200 = vmatmul.mubr.bf16.gmra.mxu0 %v89
    %v201 = vpop.f32.mrf.mxu0
    %v202 = vadd.f32 %v53, %v201
    %v203 = vpop.f32.mrf.mxu0
    %v204 = vpop.f32.mrf.mxu0
    %v205 = vadd.f32 %v53, %v204
    %v206 = vpop.f32.mrf.mxu0
    %207 = vmatprep.mubr.bf16.mxu0 0
    %208 = vmatmul.mubr.bf16.gmra.mxu0 %v90
    %v209 = vpop.f32.mrf.mxu0
    %v210 = vadd.f32 %v53, %v209
    %v211 = vpop.f32.mrf.mxu0
    %v212 = vpop.f32.mrf.mxu0
    %v213 = vadd.f32 %v53, %v212
    %v214 = vpop.f32.mrf.mxu0
    %215 = vmatprep.mubr.bf16.mxu0 0
    %216 = vmatmul.mubr.bf16.gmra.mxu0 %v91
    %v217 = vpop.f32.mrf.mxu0
    %v218 = vadd.f32 %v53, %v217
    %v219 = vpop.f32.mrf.mxu0
    %v220 = vpop.f32.mrf.mxu0
    %v221 = vadd.f32 %v53, %v220
    %v222 = vpop.f32.mrf.mxu0
    %223 = vmatprep.mubr.bf16.mxu0 0
    %224 = vmatmul.mubr.bf16.gmra.mxu0 %v92
    %v225 = vpop.f32.mrf.mxu0
    %v226 = vadd.f32 %v53, %v225
    %v227 = vpop.f32.mrf.mxu0
    %v228 = vpop.f32.mrf.mxu0
    %v229 = vadd.f32 %v53, %v228
    %v230 = vpop.f32.mrf.mxu0
    %231 = vmatprep.mubr.bf16.mxu0 0
    %232 = vmatmul.mubr.bf16.gmra.mxu0 %v93
    %v233 = vpop.f32.mrf.mxu0
    %v234 = vadd.f32 %v53, %v233
    %v235 = vpop.f32.mrf.mxu0
    %v236 = vpop.f32.mrf.mxu0
    %v237 = vadd.f32 %v53, %v236
    %v238 = vpop.f32.mrf.mxu0
    %239 = vmatprep.mubr.bf16.mxu0 0
    %240 = vmatmul.mubr.bf16.gmra.mxu0 %v94
    %v241 = vpop.f32.mrf.mxu0
    %v242 = vadd.f32 %v53, %v241
    %v243 = vpop.f32.mrf.mxu0
    %v244 = vpop.f32.mrf.mxu0
    %v245 = vadd.f32 %v53, %v244
    %v246 = vpop.f32.mrf.mxu0
    %247 = vdwg.mxu0
    %v248 = vmax.f32 %v186, 0.0
    %v249 = vmax.f32 %v189, 0.0
    %v250 = vmax.f32 %v194, 0.0
    %v251 = vmax.f32 %v197, 0.0
    %v252 = vmax.f32 %v202, 0.0
    %v253 = vmax.f32 %v205, 0.0
    %v254 = vmax.f32 %v210, 0.0
    %v255 = vmax.f32 %v213, 0.0
    %v256 = vmax.f32 %v218, 0.0
    %v257 = vmax.f32 %v221, 0.0
    %v258 = vmax.f32 %v226, 0.0
    %v259 = vmax.f32 %v229, 0.0
    %v260 = vmax.f32 %v234, 0.0
    %v261 = vmax.f32 %v237, 0.0
    %v262 = vmax.f32 %v242, 0.0
    %v263 = vmax.f32 %v245, 0.0
    %v264 = vpack.c.bf16 %v249, %v248
    %v265 = vpack.c.bf16 %v251, %v250
    %v266 = vpack.c.bf16 %v253, %v252
    %v267 = vpack.c.bf16 %v255, %v254
    %v268 = vpack.c.bf16 %v257, %v256
    %v269 = vpack.c.bf16 %v259, %v258
    %v270 = vpack.c.bf16 %v261, %v260
    %v271 = vpack.c.bf16 %v263, %v262
    %v280 = vunpack.c.l.b16 %v264
    %v281 = vunpack.c.h.b16 %v264
    %v282 = vunpack.c.l.b16 %v265
    %v283 = vunpack.c.h.b16 %v265
    %v284 = vunpack.c.l.b16 %v266
    %v285 = vunpack.c.h.b16 %v266
    %v286 = vunpack.c.l.b16 %v267
    %v287 = vunpack.c.h.b16 %v267
    %v288 = vunpack.c.l.b16 %v268
    %v289 = vunpack.c.h.b16 %v268
    %v290 = vunpack.c.l.b16 %v269
    %v291 = vunpack.c.h.b16 %v269
    %v292 = vunpack.c.l.b16 %v270
    %v293 = vunpack.c.h.b16 %v270
    %v294 = vunpack.c.l.b16 %v271
    %v295 = vunpack.c.h.b16 %v271
    %v296 = vpack.c.b16 %v280, %v280
    %v297 = vpack.c.b16 %v281, %v281
    %v298 = vpack.c.b16 %v282, %v282
    %v299 = vpack.c.b16 %v283, %v283
    %v300 = vpack.c.b16 %v284, %v284
    %v301 = vpack.c.b16 %v285, %v285
    %v302 = vpack.c.b16 %v286, %v286
    %v303 = vpack.c.b16 %v287, %v287
    %v304 = vpack.c.b16 %v288, %v288
    %v305 = vpack.c.b16 %v289, %v289
    %v306 = vpack.c.b16 %v290, %v290
    %v307 = vpack.c.b16 %v291, %v291
    %v308 = vpack.c.b16 %v292, %v292
    %v309 = vpack.c.b16 %v293, %v293
    %v310 = vpack.c.b16 %v294, %v294
    %v311 = vpack.c.b16 %v295, %v295
    %vm328 = vcmask 519168
    %329 = vst.msk [vmem:[#allocation2] sm:$0xf] %vm328, %v296
    %330 = vst.msk [vmem:[#allocation2 + $0x4] sm:$0xf] %vm328, %v297
    %331 = vst.msk [vmem:[#allocation2 + $0x8] sm:$0xf] %vm328, %v298
    %332 = vst.msk [vmem:[#allocation2 + $0xc] sm:$0xf] %vm328, %v299
    %333 = vst.msk [vmem:[#allocation2 + $0x10] sm:$0xf] %vm328, %v300
    %334 = vst.msk [vmem:[#allocation2 + $0x14] sm:$0xf] %vm328, %v301
    %335 = vst.msk [vmem:[#allocation2 + $0x18] sm:$0xf] %vm328, %v302
    %336 = vst.msk [vmem:[#allocation2 + $0x1c] sm:$0xf] %vm328, %v303
    %337 = vst.msk [vmem:[#allocation2 + $0x20] sm:$0xf] %vm328, %v304
    %338 = vst.msk [vmem:[#allocation2 + $0x24] sm:$0xf] %vm328, %v305
    %339 = vst.msk [vmem:[#allocation2 + $0x28] sm:$0xf] %vm328, %v306
    %340 = vst.msk [vmem:[#allocation2 + $0x2c] sm:$0xf] %vm328, %v307
    %341 = vst.msk [vmem:[#allocation2 + $0x30] sm:$0xf] %vm328, %v308
    %342 = vst.msk [vmem:[#allocation2 + $0x34] sm:$0xf] %vm328, %v309
    %343 = vst.msk [vmem:[#allocation2 + $0x38] sm:$0xf] %vm328, %v310
    %344 = vst.msk [vmem:[#allocation2 + $0x3c] sm:$0xf] %vm328, %v311
    // Predicated region
    $region14: #{conv_bn_act.1} parent=1 // pred_check
      _
    $region15: #{conv_bn_act.1} parent=1 // pred_check_branch
      %346 = sbr.rel (0) target = $region17
    $region16: #{conv_bn_act.1} parent=1 // pred_region
      %s348 = ssub.s32 1024, 1024
      %349 = vsyncadd [#allocation3], %s348
      %s350 = sshll.u32 [#allocation2], 4
      %s351 = int_to_ptr.vmem [resolvable:$true] %s350
      %356 = dma.vmem_to_hbm [thread:$0]  %s351, 1024, %s3, [#allocation3], 64, 64, 4
    $region17: #{conv_bn_act.1} parent=1 // pred_fallthru
      _
    // Predicated region
    $region18: #{conv_bn_act.1} parent=1 // pred_check
      _
    $region19: #{conv_bn_act.1} parent=1 // pred_check_branch
      %358 = sbr.rel (0) target = $region21
    $region20: #{conv_bn_act.1} parent=1 // pred_region
      %359 = dma.done [#allocation3], 1024
    $region21: #{conv_bn_act.1} parent=1 // pred_fallthru
      _
    %360 = vsyncpa [#allocation3], 1

</llo_original>
